<compile_context>
chip_gen: v7x
topology: tpu7x:2x2x1
jax: 0.10.0
libtpu: 0.0.40
codegen_flags: <defaults>
</compile_context>

<pallas_src>
import jax
import jax.numpy as jnp
from jax.experimental import pallas as pl
from jax.experimental.pallas import tpu as pltpu


def _round_up(x, m):
    return (x + m - 1) // m * m


def _pick_tile(hp, candidates):
    """Largest candidate tile that evenly divides hp (hp is a multiple of 128)."""
    for t in candidates:
        if hp % t == 0:
            return t
    return 128


def residual_block_kernel(x_mm_ref, x_res_ref, w_ref, b_ref, o_ref, acc_ref):
    """Streamed matmul with f32 accumulator; ReLU + residual on the last K step.

    Grid = (batch tiles, N tiles, K tiles); K is the reduction axis (innermost).
      x_mm_ref : [TB, TK] f32   x block for the matmul (cast to bf16 for MXU)
      x_res_ref: [TB, TN] f32   x block for the residual add
      w_ref    : [TK, TN] bf16  BN-folded weight block
      b_ref    : [1,  TN] f32   BN-folded bias block
      o_ref    : [TB, TN] f32   output block
      acc_ref  : [TB, TN] f32   VMEM accumulator (resident across K)
    """
    k = pl.program_id(2)

    @pl.when(k == 0)
    def _init():
        acc_ref[...] = jnp.zeros_like(acc_ref)

    acc_ref[...] += jnp.dot(
        x_mm_ref[...].astype(jnp.bfloat16), w_ref[...],
        preferred_element_type=jnp.float32)

    @pl.when(k == pl.num_programs(2) - 1)
    def _finalize():
        r = acc_ref[...] + b_ref[...]
        o_ref[...] = x_res_ref[...] + jnp.maximum(r, 0.0)


def residual_block_forward(x, w_folded, b_folded):
    """x: [B, H] f32; w_folded: [Hp, Hp] bf16; b_folded: [1, Hp] f32 (Hp % 128 == 0)."""
    B, H = x.shape
    Hp = w_folded.shape[0]
    assert Hp % 128 == 0 and Hp >= H

    # Batch tile: multiple of 8 sublanes; up to 512 rows for large batches
    # (mem-bound regime: bigger tiles get closer to the HBM roofline).
    if B >= 512:
        TB = 512
    elif B >= 256:
        TB = 256
    else:
        TB = _round_up(B, 8)
    Bp = _round_up(B, TB)

    # N tile large (lane-dense output stores, fewer re-reads of the x matmul
    # operand); K tile moderate (weight streaming granularity).
    TN = _pick_tile(Hp, (1024, 512, 256, 128))
    TK = _pick_tile(Hp, (512, 256, 128))
    grid_m, grid_n, grid_k = Bp // TB, Hp // TN, Hp // TK

    # Pad only if needed (padding is a full extra HBM round-trip of x/out).
    need_pad = (Bp != B) or (Hp != H)
    xp = x
    if need_pad:
        xp = jnp.zeros((Bp, Hp), jnp.float32).at[:B, :H].set(x)

    # Explicit scoped-VMEM budget sized from the actual tile footprint
    # (double-buffered inputs/outputs + accumulator scratch) plus headroom.
    vmem_bytes = (
        2 * TB * TK * 4        # x matmul blocks (f32)
        + 2 * TB * TN * 4      # x residual blocks (f32)
        + 2 * TK * TN * 2      # weight blocks (bf16)
        + 2 * 1 * TN * 4       # bias blocks
        + 2 * TB * TN * 4      # output blocks
        + TB * TN * 4          # accumulator scratch
    )
    vmem_limit = min(vmem_bytes + (8 << 20), 56 << 20)  # safe on v5e/v6e/v7x

    cost = pl.CostEstimate(
        flops=2 * Bp * Hp * Hp + 4 * Bp * Hp,
        transcendentals=0,
        bytes_accessed=(
            grid_m * grid_n * grid_k * TB * TK * 4      # x matmul blocks
            + grid_m * grid_n * TB * TN * 4             # x residual blocks
            + grid_m * grid_n * grid_k * TK * TN * 2    # weight blocks
            + grid_m * grid_n * TN * 4                  # bias blocks
            + grid_m * grid_n * TB * TN * 4             # output blocks
        ),
    )

    out = pl.pallas_call(
        residual_block_kernel,
        out_shape=jax.ShapeDtypeStruct((Bp, Hp), jnp.float32),
        grid_spec=pltpu.PrefetchScalarGridSpec(
            num_scalar_prefetch=0,
            grid=(grid_m, grid_n, grid_k),
            in_specs=[
                pl.BlockSpec((TB, TK), lambda i, j, k: (i, k)),   # x (matmul)
                pl.BlockSpec((TB, TN), lambda i, j, k: (i, j)),   # x (residual)
                pl.BlockSpec((TK, TN), lambda i, j, k: (k, j)),   # folded weight
                pl.BlockSpec((1, TN), lambda i, j, k: (0, j)),    # folded bias
            ],
            out_specs=pl.BlockSpec((TB, TN), lambda i, j, k: (i, j)),
            scratch_shapes=[pltpu.VMEM((TB, TN), jnp.float32)],
        ),
        compiler_params=pltpu.CompilerParams(
            dimension_semantics=("parallel", "parallel", "arbitrary"),
            vmem_limit_bytes=vmem_limit,
        ),
        cost_estimate=cost,
    )(xp, xp, w_folded, b_folded)

    if need_pad:
        # Padded batch rows of the internal output hold relu(b_folded) != 0;
        # they are discarded here and must never be reused.
        out = out[:B, :H]
    return out


def init_params(key, hidden_dim, eps=1e-5):
    """Raw PyTorch-style ResidualBlock params. Linear weight stored [in, out]."""
    kw, kb, k1, k2, k3, k4 = jax.random.split(key, 6)
    bound = 1.0 / float(hidden_dim) ** 0.5
    w = jax.random.uniform(kw, (hidden_dim, hidden_dim), jnp.float32, -bound, bound)
    b = jax.random.uniform(kb, (hidden_dim,), jnp.float32, -bound, bound)
    gamma = jax.random.uniform(k1, (hidden_dim,), jnp.float32, 0.8, 1.2)
    beta = 0.1 * jax.random.normal(k2, (hidden_dim,), jnp.float32)
    running_mean = 0.1 * jax.random.normal(k3, (hidden_dim,), jnp.float32)
    running_var = jax.random.uniform(k4, (hidden_dim,), jnp.float32, 0.5, 1.5)
    return dict(w=w, b=b, gamma=gamma, beta=beta,
                running_mean=running_mean, running_var=running_var, eps=eps)


def fold_and_pad_params(p):
    """Fold eval-mode BN into the Linear and pad features to a multiple of 128.

    Padded weight columns / bias entries are zero, so relu(0) = 0 and the
    residual in the padded lanes stays 0 (sliced away in the wrapper).
    """
    H = p["w"].shape[0]
    Hp = _round_up(H, 128)
    scale = p["gamma"] / jnp.sqrt(p["running_var"] + p["eps"])   # [H]
    shift = p["beta"] - p["running_mean"] * scale                # [H]
    w_f = p["w"] * scale[None, :]                                # column scale
    b_f = p["b"] * scale + shift
    w_pad = jnp.zeros((Hp, Hp), jnp.float32).at[:H, :H].set(w_f)
    b_pad = jnp.zeros((1, Hp), jnp.float32).at[0, :H].set(b_f)
    return w_pad.astype(jnp.bfloat16), b_pad


def reference_forward(x, p):
    """Pure-JAX f32 reference with unfolded BN (eval mode)."""
    h = x @ p["w"] + p["b"]
    h = (h - p["running_mean"]) / jnp.sqrt(p["running_var"] + p["eps"])
    h = h * p["gamma"] + p["beta"]
    return x + jnp.maximum(h, 0.0)


def _run_case(key, batch, hidden_dim, rtol, atol):
    kx, kp = jax.random.split(key)
    x = jax.random.normal(kx, (batch, hidden_dim), dtype=jnp.float32)
    params = init_params(kp, hidden_dim)
    w_folded, b_folded = fold_and_pad_params(params)

    out = residual_block_forward(x, w_folded, b_folded)
    out = jax.block_until_ready(out)
    assert out.shape == (batch, hidden_dim)

    ref = reference_forward(x, params)
    if not bool(jnp.allclose(out, ref, rtol=rtol, atol=atol)):
        max_err = float(jnp.max(jnp.abs(out - ref)))
        raise AssertionError(
            f"Pallas kernel mismatch (B={batch}, H={hidden_dim}, max_err={max_err})")


if __name__ == "__main__":
    key = jax.random.PRNGKey(0)
    k1, k2 = jax.random.split(key)

    # Primary small case matching the module (hidden=32, batch=8).
    # bf16 MXU inputs -> slightly looser tolerance than pure-f32.
    _run_case(k1, batch=8, hidden_dim=32, rtol=2e-2, atol=2e-2)

    # Larger case exercising batch/feature padding and the multi-step
    # (M, N, K) streamed grid with accumulation.  Tolerance scaled for the
    # longer bf16 reduction.
    _run_case(k2, batch=272, hidden_dim=288, rtol=2e-2, atol=5e-2)

    print("KERNEL_OK")
</pallas_src>

<mosaic_0001>
module attributes {stable_mosaic.version = 11 : i64} {
  func.func @residual_block_kernel(%arg0: i32, %arg1: i32, %arg2: i32, %arg3: memref<8x128xf32, #tpu.memory_space<vmem>>, %arg4: memref<8x128xf32, #tpu.memory_space<vmem>>, %arg5: memref<128x128xbf16, #tpu.memory_space<vmem>>, %arg6: memref<1x128xf32, #tpu.memory_space<vmem>>, %arg7: memref<8x128xf32, #tpu.memory_space<vmem>>, %arg8: memref<8x128xf32, #tpu.memory_space<vmem>>) attributes {dimension_semantics = [#tpu.dimension_semantics<parallel>, #tpu.dimension_semantics<parallel>, #tpu.dimension_semantics<arbitrary>], iteration_bounds = array<i64: 1, 1, 1>, scalar_prefetch = 0 : i64, scratch_operands = 1 : i64, tpu.core_type = #tpu.core_type<tc>, window_params = [{transform_indices = @transform_0, window_bounds = array<i64: 8, 128>}, {transform_indices = @transform_1, window_bounds = array<i64: 8, 128>}, {transform_indices = @transform_2, window_bounds = array<i64: 128, 128>}, {transform_indices = @transform_3, window_bounds = array<i64: 1, 128>}, {transform_indices = @transform_4, window_bounds = array<i64: 8, 128>}]} {
    %c0_i32 = arith.constant 0 : i32
    %0 = arith.cmpi eq, %arg2, %c0_i32 : i32
    %1 = arith.extui %0 : i1 to i32
    %c0_i32_0 = arith.constant 0 : i32
    %2 = arith.cmpi ne, %1, %c0_i32_0 : i32
    scf.if %2 {
      %cst_10 = arith.constant 0.000000e+00 : f32
      %13 = vector.broadcast %cst_10 : f32 to vector<8x128xf32>
      %c0_11 = arith.constant 0 : index
      %c0_12 = arith.constant 0 : index
      %14 = vector.load %arg8[%c0_11, %c0_12] : memref<8x128xf32, #tpu.memory_space<vmem>>, vector<8x128xf32>
      tpu.vector_store %arg8[%c0_11, %c0_12], %13 {strides = array<i32>} : memref<8x128xf32, #tpu.memory_space<vmem>>, vector<8x128xf32>,
    } else {
    }
    %c0 = arith.constant 0 : index
    %c0_1 = arith.constant 0 : index
    %3 = vector.load %arg8[%c0, %c0_1] : memref<8x128xf32, #tpu.memory_space<vmem>>, vector<8x128xf32>
    %c0_2 = arith.constant 0 : index
    %c0_3 = arith.constant 0 : index
    %4 = vector.load %arg3[%c0_2, %c0_3] : memref<8x128xf32, #tpu.memory_space<vmem>>, vector<8x128xf32>
    %5 = arith.truncf %4 : vector<8x128xf32> to vector<8x128xbf16>
    %c0_4 = arith.constant 0 : index
    %c0_5 = arith.constant 0 : index
    %6 = vector.load %arg5[%c0_4, %c0_5] : memref<128x128xbf16, #tpu.memory_space<vmem>>, vector<128x128xbf16>
    %cst = arith.constant dense<0.000000e+00> : vector<8x128xf32>
    %7 = tpu.matmul %5, %6, %cst {dimension_numbers = #tpu.dot_dimension_numbers<[1], [0], [0], [1], [0, 0, 1, 1], [], []>} : vector<8x128xbf16>, vector<128x128xbf16>, vector<8x128xf32> -> vector<8x128xf32>
    %8 = arith.addf %3, %7 : vector<8x128xf32>
    %c0_6 = arith.constant 0 : index
    %c0_7 = arith.constant 0 : index
    %9 = vector.load %arg8[%c0_6, %c0_7] : memref<8x128xf32, #tpu.memory_space<vmem>>, vector<8x128xf32>
    tpu.vector_store %arg8[%c0_6, %c0_7], %8 {strides = array<i32>} : memref<8x128xf32, #tpu.memory_space<vmem>>, vector<8x128xf32>,
    %c0_i32_8 = arith.constant 0 : i32
    %10 = arith.cmpi eq, %arg2, %c0_i32_8 : i32
    %11 = arith.extui %10 : i1 to i32
    %c0_i32_9 = arith.constant 0 : i32
    %12 = arith.cmpi ne, %11, %c0_i32_9 : i32
    scf.if %12 {
      %c0_10 = arith.constant 0 : index
      %c0_11 = arith.constant 0 : index
      %13 = vector.load %arg8[%c0_10, %c0_11] : memref<8x128xf32, #tpu.memory_space<vmem>>, vector<8x128xf32>
      %c0_12 = arith.constant 0 : index
      %c0_13 = arith.constant 0 : index
      %14 = vector.load %arg6[%c0_12, %c0_13] : memref<1x128xf32, #tpu.memory_space<vmem>>, vector<1x128xf32>
      %15 = vector.broadcast %14 : vector<1x128xf32> to vector<8x128xf32>
      %16 = arith.addf %13, %15 : vector<8x128xf32>
      %c0_14 = arith.constant 0 : index
      %c0_15 = arith.constant 0 : index
      %17 = vector.load %arg4[%c0_14, %c0_15] : memref<8x128xf32, #tpu.memory_space<vmem>>, vector<8x128xf32>
      %cst_16 = arith.constant 0.000000e+00 : f32
      %18 = vector.broadcast %cst_16 : f32 to vector<8x128xf32>
      %19 = arith.maximumf %16, %18 : vector<8x128xf32>
      %20 = arith.addf %17, %19 : vector<8x128xf32>
      %c0_17 = arith.constant 0 : index
      %c0_18 = arith.constant 0 : index
      %21 = vector.load %arg7[%c0_17, %c0_18] : memref<8x128xf32, #tpu.memory_space<vmem>>, vector<8x128xf32>
      tpu.vector_store %arg7[%c0_17, %c0_18], %20 {strides = array<i32>} : memref<8x128xf32, #tpu.memory_space<vmem>>, vector<8x128xf32>,
    } else {
    }
    return
  }
  func.func @transform_0(%arg0: i32, %arg1: i32, %arg2: i32) -> (i32, i32) {
    %c0_i32 = arith.constant 0 : i32
    return %arg0, %arg2 : i32, i32
  }
  func.func @transform_1(%arg0: i32, %arg1: i32, %arg2: i32) -> (i32, i32) {
    %c0_i32 = arith.constant 0 : i32
    return %arg0, %arg1 : i32, i32
  }
  func.func @transform_2(%arg0: i32, %arg1: i32, %arg2: i32) -> (i32, i32) {
    %c0_i32 = arith.constant 0 : i32
    return %arg2, %arg1 : i32, i32
  }
  func.func @transform_3(%arg0: i32, %arg1: i32, %arg2: i32) -> (i32, i32) {
    %c0_i32 = arith.constant 0 : i32
    %c0_i32_0 = arith.constant 0 : i32
    return %c0_i32, %arg1 : i32, i32
  }
  func.func @transform_4(%arg0: i32, %arg1: i32, %arg2: i32) -> (i32, i32) {
    %c0_i32 = arith.constant 0 : i32
    return %arg0, %arg1 : i32, i32
  }
}

</mosaic_0001>

<llo_original>
// kernel: tpu_custom_call.1
$region0: #{tpu_custom_call.1}
  #allocation0 [shape = 'u32[]', space=smem, size = 0x4, offset = 0x4, fixed_abs, tag = 'smem constant byte address 0x4 - core index']
  #allocation1 [shape = 'u32[144,128]{1,0:T(1,128)}', space=vmem, size = 0x12000, scoped, tag = 'internal scratch']
  #allocation2 [shape = 'f32[8,128]{1,0:T(8,128)}', space=vmem, size = 0x1000, scoped, tag = 'scratch operand']
  %s0 = inlined_call_operand.hbm [shape: f32[8,128], index: 0, kind: input, shape index: {}]
  %s1 = inlined_call_operand.hbm [shape: f32[8,128], index: 1, kind: input, shape index: {}]
  %s2 = inlined_call_operand.hbm [shape: bf16[128,128], index: 2, kind: input, shape index: {}]
  %s3 = inlined_call_operand.vmem [shape: f32[1,128], index: 3, kind: input, shape index: {}]
  %s4 = inlined_call_operand.hbm [shape: f32[8,128], index: 4, kind: output, shape index: {}]
  %s5 = sld [smem:[#allocation0]]
  $region46: #{tpu_custom_call.1} parent=0
    _
  %s7 = ssub.s32 1, %s5
  %s8 = scalar_select 0, %s7, %s5
  $region1: #{tpu_custom_call.1} parent=0
    #allocation3 [shape = 'u8[4096]{0}', space=vmem, size = 0x1000, scoped, tag = 'input window, operand 0, single buffered']
    #allocation4 [shape = 's32[1]{0}', space=sflag, size = 0x4, scoped, tag = 'scoped memory for tpu_custom_call.1']
    #allocation5 [shape = 's32[1]{0}', space=sflag, size = 0x4, scoped, tag = 'scoped memory for tpu_custom_call.1']
    #allocation6 [shape = 'u8[4096]{0}', space=vmem, size = 0x1000, scoped, tag = 'input window, operand 1, single buffered']
    #allocation7 [shape = 's32[1]{0}', space=sflag, size = 0x4, scoped, tag = 'scoped memory for tpu_custom_call.1']
    #allocation8 [shape = 'u8[32768]{0}', space=vmem, size = 0x8000, scoped, tag = 'input window, operand 2, single buffered']
    #allocation9 [shape = 'u8[4096]{0}', space=vmem, size = 0x1000, scoped, tag = 'output window, operand 0, single buffered']
    %9 = vsyncpa [#allocation4], 0
    %10 = vsyncpa [#allocation7], 0
    %11 = vsyncpa [#allocation5], 0
    // Predicated region
    $region2: #{tpu_custom_call.1} parent=1 // pred_check
      _
    $region3: #{tpu_custom_call.1} parent=1 // pred_check_branch
      %13 = sbr.rel (0) target = $region5
    $region4: #{tpu_custom_call.1} parent=1 // pred_region
      %s15 = ssub.s32 128, 128
      %16 = vsyncadd [#allocation4], %s15
      %s18 = sshll.u32 [#allocation3], 4
      %s19 = int_to_ptr.vmem [resolvable:$true] %s18
      %21 = dma.hbm_to_vmem [thread:$0]  %s0, 128, %s19, [#allocation4]
    $region5: #{tpu_custom_call.1} parent=1 // pred_fallthru
      _
    // Predicated region
    $region6: #{tpu_custom_call.1} parent=1 // pred_check
      _
    $region7: #{tpu_custom_call.1} parent=1 // pred_check_branch
      %23 = sbr.rel (0) target = $region9
    $region8: #{tpu_custom_call.1} parent=1 // pred_region
      %s25 = ssub.s32 128, 128
      %26 = vsyncadd [#allocation7], %s25
      %s28 = sshll.u32 [#allocation6], 4
      %s29 = int_to_ptr.vmem [resolvable:$true] %s28
      %31 = dma.hbm_to_vmem [thread:$0]  %s1, 128, %s29, [#allocation7]
    $region9: #{tpu_custom_call.1} parent=1 // pred_fallthru
      _
    // Predicated region
    $region10: #{tpu_custom_call.1} parent=1 // pred_check
      _
    $region11: #{tpu_custom_call.1} parent=1 // pred_check_branch
      %33 = sbr.rel (0) target = $region13
    $region12: #{tpu_custom_call.1} parent=1 // pred_region
      %s35 = ssub.s32 1024, 1024
      %36 = vsyncadd [#allocation7], %s35
      %s37 = sshll.u32 [#allocation8], 4
      %s38 = int_to_ptr.vmem [resolvable:$true] %s37
      %43 = dma.hbm_to_vmem [thread:$0]  %s2, 1024, %s38, [#allocation7], 64, 64, 4
    $region13: #{tpu_custom_call.1} parent=1 // pred_fallthru
      _
    // Predicated region
    $region14: #{tpu_custom_call.1} parent=1 // pred_check
      _
    $region15: #{tpu_custom_call.1} parent=1 // pred_check_branch
      %45 = sbr.rel (0) target = $region17
    $region16: #{tpu_custom_call.1} parent=1 // pred_region
      _
    $region17: #{tpu_custom_call.1} parent=1 // pred_fallthru
      _
    // Predicated region
    $region18: #{tpu_custom_call.1} parent=1 // pred_check
      _
    $region19: #{tpu_custom_call.1} parent=1 // pred_check_branch
      %47 = sbr.rel (0) target = $region21
    $region20: #{tpu_custom_call.1} parent=1 // pred_region
      %48 = dma.done [#allocation4], 128
    $region21: #{tpu_custom_call.1} parent=1 // pred_fallthru
      _
    // Predicated region
    $region22: #{tpu_custom_call.1} parent=1 // pred_check
      _
    $region23: #{tpu_custom_call.1} parent=1 // pred_check_branch
      %50 = sbr.rel (0) target = $region25
    $region24: #{tpu_custom_call.1} parent=1 // pred_region
      %51 = dma.done [#allocation7], 128
    $region25: #{tpu_custom_call.1} parent=1 // pred_fallthru
      _
    // Predicated region
    $region26: #{tpu_custom_call.1} parent=1 // pred_check
      _
    $region27: #{tpu_custom_call.1} parent=1 // pred_check_branch
      %53 = sbr.rel (0) target = $region29
    $region28: #{tpu_custom_call.1} parent=1 // pred_region
      %54 = dma.done [#allocation7], 1024
    $region29: #{tpu_custom_call.1} parent=1 // pred_fallthru
      _
    %p56 = scmp.eq.s32.totalorder 0, 0
    // Predicated region
    $region30: #{tpu_custom_call.1} parent=1 // pred_check
      %p57 = pneg %p56
    $region31: #{tpu_custom_call.1} parent=1 // pred_check_branch
      %59 = sbr.rel (%p57) target = $region33
    $region32: #{tpu_custom_call.1} parent=1 // pred_region
      %60 = vst [vmem:[#allocation2] sm:$0xff] 0.0
    $region33: #{tpu_custom_call.1} parent=1 // pred_fallthru
      _
    %v61 = vld [vmem:[#allocation2] sm:$0xff]
    %v62 = vld [vmem:[#allocation3] sm:$0xff]
    %v63 = vpack.c.bf16 %v62, %v62
    %v64 = vld [vmem:[#allocation8] sm:$0xf]
    %v65 = vld [vmem:[#allocation8 + $0x4] sm:$0xf]
    %v66 = vld [vmem:[#allocation8 + $0x8] sm:$0xf]
    %v67 = vld [vmem:[#allocation8 + $0xc] sm:$0xf]
    %v68 = vld [vmem:[#allocation8 + $0x10] sm:$0xf]
    %v69 = vld [vmem:[#allocation8 + $0x14] sm:$0xf]
    %v70 = vld [vmem:[#allocation8 + $0x18] sm:$0xf]
    %v71 = vld [vmem:[#allocation8 + $0x1c] sm:$0xf]
    %v72 = vld [vmem:[#allocation8 + $0x20] sm:$0xf]
    %v73 = vld [vmem:[#allocation8 + $0x24] sm:$0xf]
    %v74 = vld [vmem:[#allocation8 + $0x28] sm:$0xf]
    %v75 = vld [vmem:[#allocation8 + $0x2c] sm:$0xf]
    %v76 = vld [vmem:[#allocation8 + $0x30] sm:$0xf]
    %v77 = vld [vmem:[#allocation8 + $0x34] sm:$0xf]
    %v78 = vld [vmem:[#allocation8 + $0x38] sm:$0xf]
    %v79 = vld [vmem:[#allocation8 + $0x3c] sm:$0xf]
    %v96 = vunpack.c.l.b16 %v64
    %v97 = vunpack.c.l.b16 %v65
    %v98 = vunpack.c.l.b16 %v66
    %v99 = vunpack.c.l.b16 %v67
    %v100 = vunpack.c.l.b16 %v68
    %v101 = vunpack.c.l.b16 %v69
    %v102 = vunpack.c.l.b16 %v70
    %v103 = vunpack.c.l.b16 %v71
    %v104 = vunpack.c.l.b16 %v72
    %v105 = vunpack.c.l.b16 %v73
    %v106 = vunpack.c.l.b16 %v74
    %v107 = vunpack.c.l.b16 %v75
    %v108 = vunpack.c.l.b16 %v76
    %v109 = vunpack.c.l.b16 %v77
    %v110 = vunpack.c.l.b16 %v78
    %v111 = vunpack.c.l.b16 %v79
    %v112 = vpack.c.b16 %v97, %v96
    %v113 = vpack.c.b16 %v99, %v98
    %v114 = vpack.c.b16 %v101, %v100
    %v115 = vpack.c.b16 %v103, %v102
    %v116 = vpack.c.b16 %v105, %v104
    %v117 = vpack.c.b16 %v107, %v106
    %v118 = vpack.c.b16 %v109, %v108
    %v119 = vpack.c.b16 %v111, %v110
    %128 = vmatprep.subr.bf16.mxu0 0
    %129 = vmatpush1.bf16.msra.mxu0 %v112
    %130 = vmatprep.subr.bf16.mxu0 0
    %131 = vmatpush1.bf16.msra.mxu0 %v113
    %132 = vmatprep.subr.bf16.mxu0 0
    %133 = vmatpush1.bf16.msra.mxu0 %v114
    %134 = vmatprep.subr.bf16.mxu0 0
    %135 = vmatpush1.bf16.msra.mxu0 %v115
    %136 = vmatprep.subr.bf16.mxu0 0
    %137 = vmatpush1.bf16.msra.mxu0 %v116
    %138 = vmatprep.subr.bf16.mxu0 0
    %139 = vmatpush1.bf16.msra.mxu0 %v117
    %140 = vmatprep.subr.bf16.mxu0 0
    %141 = vmatpush1.bf16.msra.mxu0 %v118
    %142 = vmatprep.subr.bf16.mxu0 0
    %143 = vmatpush1.bf16.msra.mxu0 %v119
    %144 = vmatprep.subr.bf16.mxu0 0
    %145 = vmatpush1.bf16.msra.mxu0 0
    %146 = vmatprep.subr.bf16.mxu0 0
    %147 = vmatpush1.bf16.msra.mxu0 0
    %148 = vmatprep.subr.bf16.mxu0 0
    %149 = vmatpush1.bf16.msra.mxu0 0
    %150 = vmatprep.subr.bf16.mxu0 0
    %151 = vmatpush1.bf16.msra.mxu0 0
    %152 = vmatprep.subr.bf16.mxu0 0
    %153 = vmatpush1.bf16.msra.mxu0 0
    %154 = vmatprep.subr.bf16.mxu0 0
    %155 = vmatpush1.bf16.msra.mxu0 0
    %156 = vmatprep.subr.bf16.mxu0 0
    %157 = vmatpush1.bf16.msra.mxu0 0
    %158 = vmatprep.subr.bf16.mxu0 0
    %159 = vmatpush1.bf16.msra.mxu0 0
    %160 = vmatprep.mubr.bf16.mxu0 0
    %161 = vmatmul.mubr.bf16.gmra.mrb[0].mxu0 %v63
    %v162 = vpop.f32.mrb[0].mxu0
    %v163 = vadd.f32 0.0, %v162
    %v164 = vpop.f32.mrb[0].mxu0
    %v165 = vpop.f32.mrb[0].mxu0
    %v166 = vpop.f32.mrb[0].mxu0
    %167 = vdwg.mxu0
    %v168 = vadd.f32 %v61, %v163
    %169 = vst [vmem:[#allocation2] sm:$0xff] %v168
    // Predicated region
    $region34: #{tpu_custom_call.1} parent=1 // pred_check
      %p170 = pneg %p56
    $region35: #{tpu_custom_call.1} parent=1 // pred_check_branch
      %172 = sbr.rel (%p170) target = $region37
    $region36: #{tpu_custom_call.1} parent=1 // pred_region
      %v173 = vld [vmem:[#allocation2] sm:$0xff]
      %v174 = vld [vmem:[%s3] sm:$0x1]
      %v176 = vlaneseq
      %v177 = vshrl.u32 %v176, 7
      %v178 = vsub.s32 0, %v177
      %v179 = vrot.slane %v174, %v178
      %v181 = vadd.f32 %v173, %v179
      %v182 = vld [vmem:[#allocation6] sm:$0xff]
      %v183 = vmax.f32 %v181, 0.0
      %v184 = vadd.f32 %v182, %v183
      %185 = vst [vmem:[#allocation9] sm:$0xff] %v184
    $region37: #{tpu_custom_call.1} parent=1 // pred_fallthru
      _
    // Predicated region
    $region38: #{tpu_custom_call.1} parent=1 // pred_check
      _
    $region39: #{tpu_custom_call.1} parent=1 // pred_check_branch
      %187 = sbr.rel (0) target = $region41
    $region40: #{tpu_custom_call.1} parent=1 // pred_region
      %s189 = ssub.s32 128, 128
      %190 = vsyncadd [#allocation5], %s189
      %s192 = sshll.u32 [#allocation9], 4
      %s193 = int_to_ptr.vmem [resolvable:$true] %s192
      %195 = dma.vmem_to_hbm [thread:$0]  %s193, 128, %s4, [#allocation5]
    $region41: #{tpu_custom_call.1} parent=1 // pred_fallthru
      _
    // Predicated region
    $region42: #{tpu_custom_call.1} parent=1 // pred_check
      _
    $region43: #{tpu_custom_call.1} parent=1 // pred_check_branch
      %197 = sbr.rel (0) target = $region45
    $region44: #{tpu_custom_call.1} parent=1 // pred_region
      %198 = dma.done [#allocation5], 128
    $region45: #{tpu_custom_call.1} parent=1 // pred_fallthru
      _
    %199 = vsyncpa [#allocation4], 1
    %200 = vsyncpa [#allocation7], 1
    %201 = vsyncpa [#allocation5], 1

</llo_original>
